<compile_context>
chip_gen: v5e
topology: v5e:2x2
jax: 0.10.0
libtpu: 0.0.40
codegen_flags: <defaults>
</compile_context>

<pallas_src>
from functools import partial

import jax
import jax.numpy as jnp
from jax.experimental import pallas as pl
from jax.experimental.pallas import tpu as pltpu


def dual_head_kernel(x1_ref, x2_ref, w2t_ref, b2_ref, w3t_ref, b3_ref,
                     out_ref, acc_ref, *, n_s):
    s = pl.program_id(1)

    @pl.when(s == 0)
    def _init():
        acc_ref[...] = jnp.zeros_like(acc_ref)

    # d = x2 - x1 in f32 (cancellation-safe), cast only d for the MXU.  (tS, H)
    d = (x2_ref[...] - x1_ref[...]).astype(jnp.bfloat16)

    # h = tanh(d @ W2^T + b2): bf16 MXU operands, f32 accumulation.     (tS, H)
    h = jnp.tanh(
        jnp.dot(d, w2t_ref[...], preferred_element_type=jnp.float32)
        + b2_ref[...]
    )

    # hidden-dim reduction; the 1/H of the mean is folded into W3^T.    (tS, 1)
    m = jnp.sum(h, axis=1, keepdims=True)

    # linear3 partial sum for this S-chunk: VPU mul + sublane reduce.   (1, L)
    tS = x1_ref.shape[0]
    if n_s == 1:
        w3_chunk = w3t_ref[...]
    else:
        start = pl.multiple_of(s * tS, tS)
        w3_chunk = w3t_ref[pl.ds(start, tS), :]
    acc_ref[...] += jnp.sum(m * w3_chunk, axis=0, keepdims=True)

    @pl.when(s == n_s - 1)
    def _finalize():
        out_ref[...] = jnp.tanh(acc_ref[...] + b3_ref[...]).astype(out_ref.dtype)


def dual_bert_head(x1_bsh, x2_bsh, w2, b2, w3, b3, *, seq_tile=None):
    """x1_bsh, x2_bsh : (B, S, H) f32 last_hidden_states of the two encoders.
       w2 : (H, H), b2 : (H,)   -- nn.Linear(H, H), PyTorch (out, in) layout.
       w3 : (L, S), b3 : (L,)   -- nn.Linear(S, L).
       returns (B, L) float32."""
    B, S, H = x1_bsh.shape
    L = w3.shape[0]

    # Default: full-S tile (n_s = 1); only tile S for genuinely long sequences.
    if seq_tile is None:
        seq_tile = S if S <= 2048 else 512
    assert S % seq_tile == 0, (S, seq_tile)
    n_s = S // seq_tile
    if n_s > 1:
        assert seq_tile % 8 == 0, seq_tile  # aligned dynamic W3^T chunk slices

    # Layout plumbing only (all small, or dtype-preserving for activations):
    x1 = x1_bsh.astype(jnp.float32)                               # (B, S, H)
    x2 = x2_bsh.astype(jnp.float32)                               # (B, S, H)
    w2t = jnp.transpose(w2).astype(jnp.bfloat16)                  # (H, H) = W2^T
    b2_row = b2.reshape(1, H).astype(jnp.float32)                 # (1, H)
    w3t = (jnp.transpose(w3) / jnp.float32(H)).astype(jnp.float32)  # (S, L)/H
    b3_row = b3.reshape(1, L).astype(jnp.float32)                 # (1, L)

    kernel = partial(dual_head_kernel, n_s=n_s)
    inp_bufs = max(2, min(3, B * n_s))  # deeper input pipelining when it helps

    def build_and_run(use_pipeline_mode):
        def spec(shape, imap, bufs=None):
            if use_pipeline_mode and bufs is not None:
                return pl.BlockSpec(shape, imap, pipeline_mode=pl.Buffered(bufs))
            return pl.BlockSpec(shape, imap)

        call = pl.pallas_call(
            kernel,
            out_shape=jax.ShapeDtypeStruct((B, 1, L), jnp.float32),
            grid_spec=pltpu.PrefetchScalarGridSpec(
                num_scalar_prefetch=0,
                grid=(B, n_s),
                in_specs=[
                    # activations: per-(batch, S-chunk) tiles, batch squeezed
                    spec((None, seq_tile, H), lambda b, s: (b, s, 0), inp_bufs),  # x1
                    spec((None, seq_tile, H), lambda b, s: (b, s, 0), inp_bufs),  # x2
                    # resident parameters: constant index_map, single buffer
                    spec((H, H), lambda b, s: (0, 0), 1),                         # W2^T
                    spec((1, H), lambda b, s: (0, 0), 1),                         # b2
                    spec((S, L), lambda b, s: (0, 0), 1),                         # W3^T/H
                    spec((1, L), lambda b, s: (0, 0), 1),                         # b3
                ],
                # per-batch output block, resident across the (arbitrary) S axis
                out_specs=pl.BlockSpec((None, 1, L), lambda b, s: (b, 0, 0)),
                scratch_shapes=[pltpu.VMEM((1, L), jnp.float32)],
            ),
            compiler_params=pltpu.CompilerParams(
                dimension_semantics=("parallel", "arbitrary"),
            ),
        )
        return jax.block_until_ready(call(x1, x2, w2t, b2_row, w3t, b3_row))

    try:
        out = build_and_run(True)
    except Exception:
        # Fallback for jax versions without per-BlockSpec pipeline_mode support
        out = build_and_run(False)

    return out.reshape(B, L)


def reference(x1, x2, w2, b2, w3, b3):
    # plain-JAX mirror of the PyTorch forward, with the same f32 subtract +
    # bf16 MXU-operand rounding the kernel uses (f32 accumulation everywhere).
    d = x2 - x1                                                   # f32 subtract
    d = d.astype(jnp.bfloat16).astype(jnp.float32)
    w2r = w2.astype(jnp.bfloat16).astype(jnp.float32)
    h = jnp.tanh(jnp.einsum("bsh,oh->bso", d, w2r) + b2)          # (B, S, H)
    m = jnp.mean(h, axis=2)                                       # (B, S)
    return jnp.tanh(m @ w3.T + b3)                                # (B, L)


if __name__ == "__main__":
    # Small shapes consistent with the module (real module: H=1024, S=512, L=2).
    B, S, H, L = 2, 16, 32, 2

    key = jax.random.PRNGKey(0)
    k1, k2, k3, k4, k5, k6 = jax.random.split(key, 6)

    # "last_hidden_state" outputs of the two BERT encoders (external modules).
    # x2 is a small perturbation of x1, mimicking the WT-vs-mutant differential
    # that the f32 in-kernel subtraction is meant to preserve.
    x1 = jax.random.normal(k1, (B, S, H), dtype=jnp.float32)
    x2 = x1 + 0.05 * jax.random.normal(k2, (B, S, H), dtype=jnp.float32)

    # deterministic parameter init (PyTorch-Linear-style uniform bounds)
    lim2 = 1.0 / jnp.sqrt(jnp.float32(H))
    w2 = jax.random.uniform(k3, (H, H), jnp.float32, -lim2, lim2)
    b2 = jax.random.uniform(k4, (H,), jnp.float32, -lim2, lim2)
    lim3 = 1.0 / jnp.sqrt(jnp.float32(S))
    w3 = jax.random.uniform(k5, (L, S), jnp.float32, -lim3, lim3)
    b3 = jax.random.uniform(k6, (L,), jnp.float32, -lim3, lim3)

    ref = jax.block_until_ready(reference(x1, x2, w2, b2, w3, b3))

    # 1) default path: full-S tile (n_s = 1)
    out_full = dual_bert_head(x1, x2, w2, b2, w3, b3)
    out_full = jax.block_until_ready(out_full)
    assert out_full.shape == (B, L), out_full.shape
    assert jnp.allclose(out_full, ref, atol=2e-2, rtol=2e-2), (out_full, ref)

    # 2) tiled-S path: exercises the S-chunk accumulate / finalize logic
    out_tiled = dual_bert_head(x1, x2, w2, b2, w3, b3, seq_tile=8)
    out_tiled = jax.block_until_ready(out_tiled)
    assert out_tiled.shape == (B, L), out_tiled.shape
    assert jnp.allclose(out_tiled, ref, atol=2e-2, rtol=2e-2), (out_tiled, ref)

    print("KERNEL_OK")
</pallas_src>

<mosaic_0001>
module attributes {stable_mosaic.version = 11 : i64} {
  func.func @dual_head_kernel(%arg0: i32, %arg1: i32, %arg2: memref<1x16x32xf32, #tpu.memory_space<vmem>>, %arg3: memref<1x16x32xf32, #tpu.memory_space<vmem>>, %arg4: memref<32x32xbf16, #tpu.memory_space<vmem>>, %arg5: memref<1x32xf32, #tpu.memory_space<vmem>>, %arg6: memref<16x2xf32, #tpu.memory_space<vmem>>, %arg7: memref<1x2xf32, #tpu.memory_space<vmem>>, %arg8: memref<1x1x2xf32, #tpu.memory_space<vmem>>, %arg9: memref<1x2xf32, #tpu.memory_space<vmem>>) attributes {dimension_semantics = [#tpu.dimension_semantics<parallel>, #tpu.dimension_semantics<arbitrary>], iteration_bounds = array<i64: 2, 1>, scalar_prefetch = 0 : i64, scratch_operands = 1 : i64, tpu.core_type = #tpu.core_type<tc>, window_params = [{pipeline_mode = #tpu.pipeline_mode<double_buffered>, transform_indices = @transform_0, window_bounds = array<i64: 1, 16, 32>}, {pipeline_mode = #tpu.pipeline_mode<double_buffered>, transform_indices = @transform_1, window_bounds = array<i64: 1, 16, 32>}, {pipeline_mode = #tpu.pipeline_mode<synchronous>, transform_indices = @transform_2, window_bounds = array<i64: 32, 32>}, {pipeline_mode = #tpu.pipeline_mode<synchronous>, transform_indices = @transform_3, window_bounds = array<i64: 1, 32>}, {pipeline_mode = #tpu.pipeline_mode<synchronous>, transform_indices = @transform_4, window_bounds = array<i64: 16, 2>}, {pipeline_mode = #tpu.pipeline_mode<synchronous>, transform_indices = @transform_5, window_bounds = array<i64: 1, 2>}, {transform_indices = @transform_6, window_bounds = array<i64: 1, 1, 2>}]} {
    %c0_i32 = arith.constant 0 : i32
    %0 = arith.cmpi eq, %arg1, %c0_i32 : i32
    %1 = arith.extui %0 : i1 to i32
    %c0_i32_0 = arith.constant 0 : i32
    %2 = arith.cmpi ne, %1, %c0_i32_0 : i32
    scf.if %2 {
      %cst_20 = arith.constant 0.000000e+00 : f32
      %28 = vector.broadcast %cst_20 : f32 to vector<1x2xf32>
      %c0_21 = arith.constant 0 : index
      %c0_22 = arith.constant 0 : index
      %29 = vector.load %arg9[%c0_21, %c0_22] : memref<1x2xf32, #tpu.memory_space<vmem>>, vector<1x2xf32>
      tpu.vector_store %arg9[%c0_21, %c0_22], %28 {strides = array<i32>} : memref<1x2xf32, #tpu.memory_space<vmem>>, vector<1x2xf32>,
    } else {
    }
    %c0 = arith.constant 0 : index
    %c0_1 = arith.constant 0 : index
    %c0_2 = arith.constant 0 : index
    %3 = vector.load %arg3[%c0, %c0_1, %c0_2] : memref<1x16x32xf32, #tpu.memory_space<vmem>>, vector<1x16x32xf32>
    %4 = vector.shape_cast %3 : vector<1x16x32xf32> to vector<16x32xf32>
    %c0_3 = arith.constant 0 : index
    %c0_4 = arith.constant 0 : index
    %c0_5 = arith.constant 0 : index
    %5 = vector.load %arg2[%c0_3, %c0_4, %c0_5] : memref<1x16x32xf32, #tpu.memory_space<vmem>>, vector<1x16x32xf32>
    %6 = vector.shape_cast %5 : vector<1x16x32xf32> to vector<16x32xf32>
    %7 = arith.subf %4, %6 : vector<16x32xf32>
    %8 = arith.truncf %7 : vector<16x32xf32> to vector<16x32xbf16>
    %c0_6 = arith.constant 0 : index
    %c0_7 = arith.constant 0 : index
    %9 = vector.load %arg4[%c0_6, %c0_7] : memref<32x32xbf16, #tpu.memory_space<vmem>>, vector<32x32xbf16>
    %cst = arith.constant dense<0.000000e+00> : vector<16x32xf32>
    %10 = tpu.matmul %8, %9, %cst {dimension_numbers = #tpu.dot_dimension_numbers<[1], [0], [0], [1], [0, 0, 1, 1], [], []>} : vector<16x32xbf16>, vector<32x32xbf16>, vector<16x32xf32> -> vector<16x32xf32>
    %c0_8 = arith.constant 0 : index
    %c0_9 = arith.constant 0 : index
    %11 = vector.load %arg5[%c0_8, %c0_9] : memref<1x32xf32, #tpu.memory_space<vmem>>, vector<1x32xf32>
    %12 = vector.broadcast %11 : vector<1x32xf32> to vector<16x32xf32>
    %13 = arith.addf %10, %12 : vector<16x32xf32>
    %14 = math.tanh %13 : vector<16x32xf32>
    %cst_10 = arith.constant dense<0.000000e+00> : vector<16xf32>
    %15 = vector.multi_reduction <add>, %14, %cst_10 [1] : vector<16x32xf32> to vector<16xf32>
    %16 = vector.shape_cast %15 : vector<16xf32> to vector<16x1xf32>
    %c0_11 = arith.constant 0 : index
    %c0_12 = arith.constant 0 : index
    %17 = vector.load %arg6[%c0_11, %c0_12] : memref<16x2xf32, #tpu.memory_space<vmem>>, vector<16x2xf32>
    %c0_13 = arith.constant 0 : index
    %c0_14 = arith.constant 0 : index
    %18 = vector.load %arg9[%c0_13, %c0_14] : memref<1x2xf32, #tpu.memory_space<vmem>>, vector<1x2xf32>
    %19 = vector.broadcast %16 : vector<16x1xf32> to vector<16x2xf32>
    %20 = arith.mulf %19, %17 : vector<16x2xf32>
    %cst_15 = arith.constant dense<0.000000e+00> : vector<2xf32>
    %21 = vector.multi_reduction <add>, %20, %cst_15 [0] : vector<16x2xf32> to vector<2xf32>
    %22 = vector.shape_cast %21 : vector<2xf32> to vector<1x2xf32>
    %23 = arith.addf %18, %22 : vector<1x2xf32>
    %c0_16 = arith.constant 0 : index
    %c0_17 = arith.constant 0 : index
    %24 = vector.load %arg9[%c0_16, %c0_17] : memref<1x2xf32, #tpu.memory_space<vmem>>, vector<1x2xf32>
    tpu.vector_store %arg9[%c0_16, %c0_17], %23 {strides = array<i32>} : memref<1x2xf32, #tpu.memory_space<vmem>>, vector<1x2xf32>,
    %c0_i32_18 = arith.constant 0 : i32
    %25 = arith.cmpi eq, %arg1, %c0_i32_18 : i32
    %26 = arith.extui %25 : i1 to i32
    %c0_i32_19 = arith.constant 0 : i32
    %27 = arith.cmpi ne, %26, %c0_i32_19 : i32
    scf.if %27 {
      %c0_20 = arith.constant 0 : index
      %c0_21 = arith.constant 0 : index
      %28 = vector.load %arg9[%c0_20, %c0_21] : memref<1x2xf32, #tpu.memory_space<vmem>>, vector<1x2xf32>
      %c0_22 = arith.constant 0 : index
      %c0_23 = arith.constant 0 : index
      %29 = vector.load %arg7[%c0_22, %c0_23] : memref<1x2xf32, #tpu.memory_space<vmem>>, vector<1x2xf32>
      %30 = arith.addf %28, %29 : vector<1x2xf32>
      %31 = math.tanh %30 : vector<1x2xf32>
      %c0_24 = arith.constant 0 : index
      %c0_25 = arith.constant 0 : index
      %c0_26 = arith.constant 0 : index
      %32 = vector.load %arg8[%c0_24, %c0_25, %c0_26] : memref<1x1x2xf32, #tpu.memory_space<vmem>>, vector<1x1x2xf32>
      %33 = vector.shape_cast %32 : vector<1x1x2xf32> to vector<1x2xf32>
      %34 = vector.shape_cast %31 : vector<1x2xf32> to vector<1x1x2xf32>
      tpu.vector_store %arg8[%c0_24, %c0_25, %c0_26], %34 {strides = array<i32>} : memref<1x1x2xf32, #tpu.memory_space<vmem>>, vector<1x1x2xf32>,
    } else {
    }
    return
  }
  func.func @transform_0(%arg0: i32, %arg1: i32) -> (i32, i32, i32) {
    %c0_i32 = arith.constant 0 : i32
    %c0_i32_0 = arith.constant 0 : i32
    return %arg0, %arg1, %c0_i32 : i32, i32, i32
  }
  func.func @transform_1(%arg0: i32, %arg1: i32) -> (i32, i32, i32) {
    %c0_i32 = arith.constant 0 : i32
    %c0_i32_0 = arith.constant 0 : i32
    return %arg0, %arg1, %c0_i32 : i32, i32, i32
  }
  func.func @transform_2(%arg0: i32, %arg1: i32) -> (i32, i32) {
    %c0_i32 = arith.constant 0 : i32
    %c0_i32_0 = arith.constant 0 : i32
    %c0_i32_1 = arith.constant 0 : i32
    return %c0_i32, %c0_i32_0 : i32, i32
  }
  func.func @transform_3(%arg0: i32, %arg1: i32) -> (i32, i32) {
    %c0_i32 = arith.constant 0 : i32
    %c0_i32_0 = arith.constant 0 : i32
    %c0_i32_1 = arith.constant 0 : i32
    return %c0_i32, %c0_i32_0 : i32, i32
  }
  func.func @transform_4(%arg0: i32, %arg1: i32) -> (i32, i32) {
    %c0_i32 = arith.constant 0 : i32
    %c0_i32_0 = arith.constant 0 : i32
    %c0_i32_1 = arith.constant 0 : i32
    return %c0_i32, %c0_i32_0 : i32, i32
  }
  func.func @transform_5(%arg0: i32, %arg1: i32) -> (i32, i32) {
    %c0_i32 = arith.constant 0 : i32
    %c0_i32_0 = arith.constant 0 : i32
    %c0_i32_1 = arith.constant 0 : i32
    return %c0_i32, %c0_i32_0 : i32, i32
  }
  func.func @transform_6(%arg0: i32, %arg1: i32) -> (i32, i32, i32) {
    %c0_i32 = arith.constant 0 : i32
    %c0_i32_0 = arith.constant 0 : i32
    %c0_i32_1 = arith.constant 0 : i32
    return %arg0, %c0_i32, %c0_i32_0 : i32, i32, i32
  }
}

module attributes {stable_mosaic.version = 11 : i64} {
  func.func @dual_head_kernel(%arg0: i32, %arg1: i32, %arg2: memref<1x16x32xf32, #tpu.memory_space<vmem>>, %arg3: memref<1x16x32xf32, #tpu.memory_space<vmem>>, %arg4: memref<32x32xbf16, #tpu.memory_space<vmem>>, %arg5: memref<1x32xf32, #tpu.memory_space<vmem>>, %arg6: memref<16x2xf32, #tpu.memory_space<vmem>>, %arg7: memref<1x2xf32, #tpu.memory_space<vmem>>, %arg8: memref<1x1x2xf32, #tpu.memory_space<vmem>>, %arg9: memref<1x2xf32, #tpu.memory_space<vmem>>) attributes {dimension_semantics = [#tpu.dimension_semantics<parallel>, #tpu.dimension_semantics<arbitrary>], iteration_bounds = array<i64: 2, 1>, scalar_prefetch = 0 : i64, scratch_operands = 1 : i64, tpu.core_type = #tpu.core_type<tc>, window_params = [{transform_indices = @transform_0, window_bounds = array<i64: 1, 16, 32>}, {transform_indices = @transform_1, window_bounds = array<i64: 1, 16, 32>}, {pipeline_mode = #tpu.pipeline_mode<synchronous>, transform_indices = @transform_2, window_bounds = array<i64: 32, 32>}, {pipeline_mode = #tpu.pipeline_mode<synchronous>, transform_indices = @transform_3, window_bounds = array<i64: 1, 32>}, {pipeline_mode = #tpu.pipeline_mode<synchronous>, transform_indices = @transform_4, window_bounds = array<i64: 16, 2>}, {pipeline_mode = #tpu.pipeline_mode<synchronous>, transform_indices = @transform_5, window_bounds = array<i64: 1, 2>}, {transform_indices = @transform_6, window_bounds = array<i64: 1, 1, 2>}]} {
    %c0_i32 = arith.constant 0 : i32
    %0 = arith.cmpi eq, %arg1, %c0_i32 : i32
    %1 = arith.extui %0 : i1 to i32
    %c0_i32_0 = arith.constant 0 : i32
    %2 = arith.cmpi ne, %1, %c0_i32_0 : i32
    scf.if %2 {
      %cst_20 = arith.constant 0.000000e+00 : f32
      %28 = vector.broadcast %cst_20 : f32 to vector<1x2xf32>
      %c0_21 = arith.constant 0 : index
      %c0_22 = arith.constant 0 : index
      %29 = vector.load %arg9[%c0_21, %c0_22] : memref<1x2xf32, #tpu.memory_space<vmem>>, vector<1x2xf32>
      tpu.vector_store %arg9[%c0_21, %c0_22], %28 {strides = array<i32>} : memref<1x2xf32, #tpu.memory_space<vmem>>, vector<1x2xf32>,
    } else {
    }
    %c0 = arith.constant 0 : index
    %c0_1 = arith.constant 0 : index
    %c0_2 = arith.constant 0 : index
    %3 = vector.load %arg3[%c0, %c0_1, %c0_2] : memref<1x16x32xf32, #tpu.memory_space<vmem>>, vector<1x16x32xf32>
    %4 = vector.shape_cast %3 : vector<1x16x32xf32> to vector<16x32xf32>
    %c0_3 = arith.constant 0 : index
    %c0_4 = arith.constant 0 : index
    %c0_5 = arith.constant 0 : index
    %5 = vector.load %arg2[%c0_3, %c0_4, %c0_5] : memref<1x16x32xf32, #tpu.memory_space<vmem>>, vector<1x16x32xf32>
    %6 = vector.shape_cast %5 : vector<1x16x32xf32> to vector<16x32xf32>
    %7 = arith.subf %4, %6 : vector<16x32xf32>
    %8 = arith.truncf %7 : vector<16x32xf32> to vector<16x32xbf16>
    %c0_6 = arith.constant 0 : index
    %c0_7 = arith.constant 0 : index
    %9 = vector.load %arg4[%c0_6, %c0_7] : memref<32x32xbf16, #tpu.memory_space<vmem>>, vector<32x32xbf16>
    %cst = arith.constant dense<0.000000e+00> : vector<16x32xf32>
    %10 = tpu.matmul %8, %9, %cst {dimension_numbers = #tpu.dot_dimension_numbers<[1], [0], [0], [1], [0, 0, 1, 1], [], []>} : vector<16x32xbf16>, vector<32x32xbf16>, vector<16x32xf32> -> vector<16x32xf32>
    %c0_8 = arith.constant 0 : index
    %c0_9 = arith.constant 0 : index
    %11 = vector.load %arg5[%c0_8, %c0_9] : memref<1x32xf32, #tpu.memory_space<vmem>>, vector<1x32xf32>
    %12 = vector.broadcast %11 : vector<1x32xf32> to vector<16x32xf32>
    %13 = arith.addf %10, %12 : vector<16x32xf32>
    %14 = math.tanh %13 : vector<16x32xf32>
    %cst_10 = arith.constant dense<0.000000e+00> : vector<16xf32>
    %15 = vector.multi_reduction <add>, %14, %cst_10 [1] : vector<16x32xf32> to vector<16xf32>
    %16 = vector.shape_cast %15 : vector<16xf32> to vector<16x1xf32>
    %c0_11 = arith.constant 0 : index
    %c0_12 = arith.constant 0 : index
    %17 = vector.load %arg6[%c0_11, %c0_12] : memref<16x2xf32, #tpu.memory_space<vmem>>, vector<16x2xf32>
    %c0_13 = arith.constant 0 : index
    %c0_14 = arith.constant 0 : index
    %18 = vector.load %arg9[%c0_13, %c0_14] : memref<1x2xf32, #tpu.memory_space<vmem>>, vector<1x2xf32>
    %19 = vector.broadcast %16 : vector<16x1xf32> to vector<16x2xf32>
    %20 = arith.mulf %19, %17 : vector<16x2xf32>
    %cst_15 = arith.constant dense<0.000000e+00> : vector<2xf32>
    %21 = vector.multi_reduction <add>, %20, %cst_15 [0] : vector<16x2xf32> to vector<2xf32>
    %22 = vector.shape_cast %21 : vector<2xf32> to vector<1x2xf32>
    %23 = arith.addf %18, %22 : vector<1x2xf32>
    %c0_16 = arith.constant 0 : index
    %c0_17 = arith.constant 0 : index
    %24 = vector.load %arg9[%c0_16, %c0_17] : memref<1x2xf32, #tpu.memory_space<vmem>>, vector<1x2xf32>
    tpu.vector_store %arg9[%c0_16, %c0_17], %23 {strides = array<i32>} : memref<1x2xf32, #tpu.memory_space<vmem>>, vector<1x2xf32>,
    %c0_i32_18 = arith.constant 0 : i32
    %25 = arith.cmpi eq, %arg1, %c0_i32_18 : i32
    %26 = arith.extui %25 : i1 to i32
    %c0_i32_19 = arith.constant 0 : i32
    %27 = arith.cmpi ne, %26, %c0_i32_19 : i32
    scf.if %27 {
      %c0_20 = arith.constant 0 : index
      %c0_21 = arith.constant 0 : index
      %28 = vector.load %arg9[%c0_20, %c0_21] : memref<1x2xf32, #tpu.memory_space<vmem>>, vector<1x2xf32>
      %c0_22 = arith.constant 0 : index
      %c0_23 = arith.constant 0 : index
      %29 = vector.load %arg7[%c0_22, %c0_23] : memref<1x2xf32, #tpu.memory_space<vmem>>, vector<1x2xf32>
      %30 = arith.addf %28, %29 : vector<1x2xf32>
      %31 = math.tanh %30 : vector<1x2xf32>
      %c0_24 = arith.constant 0 : index
      %c0_25 = arith.constant 0 : index
      %c0_26 = arith.constant 0 : index
      %32 = vector.load %arg8[%c0_24, %c0_25, %c0_26] : memref<1x1x2xf32, #tpu.memory_space<vmem>>, vector<1x1x2xf32>
      %33 = vector.shape_cast %32 : vector<1x1x2xf32> to vector<1x2xf32>
      %34 = vector.shape_cast %31 : vector<1x2xf32> to vector<1x1x2xf32>
      tpu.vector_store %arg8[%c0_24, %c0_25, %c0_26], %34 {strides = array<i32>} : memref<1x1x2xf32, #tpu.memory_space<vmem>>, vector<1x1x2xf32>,
    } else {
    }
    return
  }
  func.func @transform_0(%arg0: i32, %arg1: i32) -> (i32, i32, i32) {
    %c0_i32 = arith.constant 0 : i32
    %c0_i32_0 = arith.constant 0 : i32
    return %arg0, %arg1, %c0_i32 : i32, i32, i32
  }
  func.func @transform_1(%arg0: i32, %arg1: i32) -> (i32, i32, i32) {
    %c0_i32 = arith.constant 0 : i32
    %c0_i32_0 = arith.constant 0 : i32
    return %arg0, %arg1, %c0_i32 : i32, i32, i32
  }
  func.func @transform_2(%arg0: i32, %arg1: i32) -> (i32, i32) {
    %c0_i32 = arith.constant 0 : i32
    %c0_i32_0 = arith.constant 0 : i32
    %c0_i32_1 = arith.constant 0 : i32
    return %c0_i32, %c0_i32_0 : i32, i32
  }
  func.func @transform_3(%arg0: i32, %arg1: i32) -> (i32, i32) {
    %c0_i32 = arith.constant 0 : i32
    %c0_i32_0 = arith.constant 0 : i32
    %c0_i32_1 = arith.constant 0 : i32
    return %c0_i32, %c0_i32_0 : i32, i32
  }
  func.func @transform_4(%arg0: i32, %arg1: i32) -> (i32, i32) {
    %c0_i32 = arith.constant 0 : i32
    %c0_i32_0 = arith.constant 0 : i32
    %c0_i32_1 = arith.constant 0 : i32
    return %c0_i32, %c0_i32_0 : i32, i32
  }
  func.func @transform_5(%arg0: i32, %arg1: i32) -> (i32, i32) {
    %c0_i32 = arith.constant 0 : i32
    %c0_i32_0 = arith.constant 0 : i32
    %c0_i32_1 = arith.constant 0 : i32
    return %c0_i32, %c0_i32_0 : i32, i32
  }
  func.func @transform_6(%arg0: i32, %arg1: i32) -> (i32, i32, i32) {
    %c0_i32 = arith.constant 0 : i32
    %c0_i32_0 = arith.constant 0 : i32
    %c0_i32_1 = arith.constant 0 : i32
    return %arg0, %c0_i32, %c0_i32_0 : i32, i32, i32
  }
}

</mosaic_0001>

<llo_original>
// kernel: tpu_custom_call.1
$region0: #{tpu_custom_call.1}
  #allocation0 [shape = 'u32[]', space=smem, size = 0x4, offset = 0x4, fixed_abs, tag = 'smem constant byte address 0x4 - core index']
  #allocation1 [shape = 'u32[72,128]{1,0:T(1,128)}', space=vmem, size = 0x9000, scoped, tag = 'internal scratch']
  #allocation2 [shape = 'f32[1,2]{1,0:T(1,128)}', space=vmem, size = 0x200, scoped, tag = 'scratch operand']
  %s0 = inlined_call_operand.hbm [shape: f32[2,16,32], index: 0, kind: input, shape index: {}]
  %s1 = inlined_call_operand.hbm [shape: f32[2,16,32], index: 1, kind: input, shape index: {}]
  %s2 = inlined_call_operand.vmem [shape: bf16[32,32], index: 2, kind: input, shape index: {}]
  %s3 = inlined_call_operand.vmem [shape: f32[1,32], index: 3, kind: input, shape index: {}]
  %s4 = inlined_call_operand.vmem [shape: f32[16,2], index: 4, kind: input, shape index: {}]
  %s5 = inlined_call_operand.vmem [shape: f32[1,2], index: 5, kind: input, shape index: {}]
  %s6 = inlined_call_operand.hbm [shape: f32[2,1,2], index: 6, kind: output, shape index: {}]
  %s7 = sld [smem:[#allocation0]]
  $region73: #{tpu_custom_call.1} parent=0
    _
  %s9 = ssub.s32 1, %s7
  %s10 = scalar_select 0, %s9, %s7
  $region1: #{tpu_custom_call.1} parent=0
    #allocation3 [shape = 'u8[16384]{0}', space=vmem, size = 0x4000, scoped, tag = 'input window, operand 0']
    #allocation4 [shape = 's32[2]{0}', space=sflag, size = 0x8, scoped, tag = 'scoped memory for tpu_custom_call.1']
    #allocation5 [shape = 's32[2]{0}', space=sflag, size = 0x8, scoped, tag = 'scoped memory for tpu_custom_call.1']
    #allocation6 [shape = 'u8[16384]{0}', space=vmem, size = 0x4000, scoped, tag = 'input window, operand 1']
    #allocation7 [shape = 's32[2]{0}', space=sflag, size = 0x8, scoped, tag = 'scoped memory for tpu_custom_call.1']
    #allocation8 [shape = 'u8[1024]{0}', space=vmem, size = 0x400, scoped, tag = 'output window, operand 0']
    %11 = vsyncpa [#allocation4], 0
    %s12 = scalar_lea.sflag [#allocation4], 1
    %13 = vsyncpa %s12, 0
    %14 = vsyncpa [#allocation7], 0
    %s15 = scalar_lea.sflag [#allocation7], 1
    %16 = vsyncpa %s15, 0
    %17 = vsyncpa [#allocation5], 0
    %s18 = scalar_lea.sflag [#allocation5], 1
    %19 = vsyncpa %s18, 0
    loop: start=0, step=1, limit=4
    $region2: #{tpu_custom_call.1} parent=1 // loop_pre_header
      _
    $region3: #{tpu_custom_call.1} parent=1 // loop_header
      %s21 = sphi 0, %s25
      %p22 = scmp.ge.s32.totalorder %s21, 4
      %s28 = sphi 0, %s40
      %s29 = sphi 0, %s36
      %s30 = sphi 0, %s28
      %s31 = sphi 0, %s29
      %s32 = sphi 0, %s30
      %s33 = sphi 0, %s31
      %s45 = sphi 0, %s47
      %s48 = sphi 0, %s45
      %s49 = sphi 0, %s48
      %s65 = sphi 0, %s49
      %s73 = sphi 0, %s75
      %s76 = sphi 0, %s73
      %s77 = sphi 0, %s76
      %s93 = sphi 0, %s77
      %s97 = sphi 0, %s97
      %s99 = sphi 0, %s97
      %s100 = sphi 0, %s99
      %s114 = sphi 0, %s100
      %s118 = sphi 0, %s118
      %s120 = sphi 0, %s118
      %s121 = sphi 0, %s120
      %s135 = sphi 0, %s121
      %s139 = sphi 0, %s139
      %s141 = sphi 0, %s139
      %s142 = sphi 0, %s141
      %s156 = sphi 0, %s142
      %s160 = sphi 0, %s160
      %s162 = sphi 0, %s160
      %s163 = sphi 0, %s162
      %s177 = sphi 0, %s163
      %s183 = sphi 0, %s185
      %s186 = sphi 0, %s183
      %s187 = sphi 0, %s186
      %s203 = sphi 0, %s187
    $region4: #{tpu_custom_call.1} parent=1 // loop_header_branch
      %24 = sbr.rel (%p22) target = $region8
    $region5: #{tpu_custom_call.1} parent=1 // loop_body
      %s26 = ssub.s32 %s21, 1
      %s27 = ssub.s32 %s21, 2
      %s34 = sadd.s32 1, %s29
      %p35 = scmp.ge.s32.totalorder %s34, 1
      %s36 = scalar_select %p35, 0, %s34
      %s37 = sadd.s32 1, %s28
      %s38 = scalar_select %p35, %s37, %s28
      %p39 = scmp.ge.s32.totalorder %s38, 2
      %s40 = scalar_select %p39, 0, %s38
      %s41 = ssub.s32 %s28, %s40
      %s42 = ssub.s32 %s29, %s36
      %s43 = sor.u32 %s41, %s42
      %p44 = scmp.eq.s32.totalorder %s43, 0
      %s46 = sadd.s32 %s45, 1
      %s47 = scalar_select %p44, %s45, %s46
      %p50 = pneg %p44
      %p51 = scmp.eq.s32.totalorder %s21, 1
      %p52 = por %p50, %p51
      %p53 = scmp.ne.s32.totalorder %s45, %s48
      %p54 = scmp.eq.s32.totalorder %s21, 0
      %p55 = por %p53, %p54
      %p56 = scmp.ne.s32.totalorder %s45, %s48
      %p57 = scmp.eq.s32.totalorder %s26, 1
      %p58 = por %p56, %p57
      %p59 = scmp.ne.s32.totalorder %s48, %s49
      %p60 = scmp.eq.s32.totalorder %s26, 0
      %p61 = por %p59, %p60
      %p62 = scmp.ne.s32.totalorder %s48, %s49
      %p63 = scmp.eq.s32.totalorder %s27, 1
      %p64 = por %p62, %p63
      %p66 = scmp.ne.s32.totalorder %s49, %s65
      %p67 = scmp.eq.s32.totalorder %s27, 0
      %p68 = por %p66, %p67
      %s69 = ssub.s32 %s28, %s40
      %s70 = ssub.s32 %s29, %s36
      %s71 = sor.u32 %s69, %s70
      %p72 = scmp.eq.s32.totalorder %s71, 0
      %s74 = sadd.s32 %s73, 1
      %s75 = scalar_select %p72, %s73, %s74
      %p78 = pneg %p72
      %p79 = scmp.eq.s32.totalorder %s21, 1
      %p80 = por %p78, %p79
      %p81 = scmp.ne.s32.totalorder %s73, %s76
      %p82 = scmp.eq.s32.totalorder %s21, 0
      %p83 = por %p81, %p82
      %p84 = scmp.ne.s32.totalorder %s73, %s76
      %p85 = scmp.eq.s32.totalorder %s26, 1
      %p86 = por %p84, %p85
      %p87 = scmp.ne.s32.totalorder %s76, %s77
      %p88 = scmp.eq.s32.totalorder %s26, 0
      %p89 = por %p87, %p88
      %p90 = scmp.ne.s32.totalorder %s76, %s77
      %p91 = scmp.eq.s32.totalorder %s27, 1
      %p92 = por %p90, %p91
      %p94 = scmp.ne.s32.totalorder %s77, %s93
      %p95 = scmp.eq.s32.totalorder %s27, 0
      %p96 = por %p94, %p95
      %s98 = sadd.s32 %s97, 1
      %p101 = scmp.eq.s32.totalorder %s21, 1
      %p102 = scmp.ne.s32.totalorder %s97, %s99
      %p103 = scmp.eq.s32.totalorder %s21, 0
      %p104 = por %p102, %p103
      %p105 = scmp.ne.s32.totalorder %s97, %s99
      %p106 = scmp.eq.s32.totalorder %s26, 1
      %p107 = por %p105, %p106
      %p108 = scmp.ne.s32.totalorder %s99, %s100
      %p109 = scmp.eq.s32.totalorder %s26, 0
      %p110 = por %p108, %p109
      %p111 = scmp.ne.s32.totalorder %s99, %s100
      %p112 = scmp.eq.s32.totalorder %s27, 1
      %p113 = por %p111, %p112
      %p115 = scmp.ne.s32.totalorder %s100, %s114
      %p116 = scmp.eq.s32.totalorder %s27, 0
      %p117 = por %p115, %p116
      %s119 = sadd.s32 %s118, 1
      %p122 = scmp.eq.s32.totalorder %s21, 1
      %p123 = scmp.ne.s32.totalorder %s118, %s120
      %p124 = scmp.eq.s32.totalorder %s21, 0
      %p125 = por %p123, %p124
      %p126 = scmp.ne.s32.totalorder %s118, %s120
      %p127 = scmp.eq.s32.totalorder %s26, 1
      %p128 = por %p126, %p127
      %p129 = scmp.ne.s32.totalorder %s120, %s121
      %p130 = scmp.eq.s32.totalorder %s26, 0
      %p131 = por %p129, %p130
      %p132 = scmp.ne.s32.totalorder %s120, %s121
      %p133 = scmp.eq.s32.totalorder %s27, 1
      %p134 = por %p132, %p133
      %p136 = scmp.ne.s32.totalorder %s121, %s135
      %p137 = scmp.eq.s32.totalorder %s27, 0
      %p138 = por %p136, %p137
      %s140 = sadd.s32 %s139, 1
      %p143 = scmp.eq.s32.totalorder %s21, 1
      %p144 = scmp.ne.s32.totalorder %s139, %s141
      %p145 = scmp.eq.s32.totalorder %s21, 0
      %p146 = por %p144, %p145
      %p147 = scmp.ne.s32.totalorder %s139, %s141
      %p148 = scmp.eq.s32.totalorder %s26, 1
      %p149 = por %p147, %p148
      %p150 = scmp.ne.s32.totalorder %s141, %s142
      %p151 = scmp.eq.s32.totalorder %s26, 0
      %p152 = por %p150, %p151
      %p153 = scmp.ne.s32.totalorder %s141, %s142
      %p154 = scmp.eq.s32.totalorder %s27, 1
      %p155 = por %p153, %p154
      %p157 = scmp.ne.s32.totalorder %s142, %s156
      %p158 = scmp.eq.s32.totalorder %s27, 0
      %p159 = por %p157, %p158
      %s161 = sadd.s32 %s160, 1
      %p164 = scmp.eq.s32.totalorder %s21, 1
      %p165 = scmp.ne.s32.totalorder %s160, %s162
      %p166 = scmp.eq.s32.totalorder %s21, 0
      %p167 = por %p165, %p166
      %p168 = scmp.ne.s32.totalorder %s160, %s162
      %p169 = scmp.eq.s32.totalorder %s26, 1
      %p170 = por %p168, %p169
      %p171 = scmp.ne.s32.totalorder %s162, %s163
      %p172 = scmp.eq.s32.totalorder %s26, 0
      %p173 = por %p171, %p172
      %p174 = scmp.ne.s32.totalorder %s162, %s163
      %p175 = scmp.eq.s32.totalorder %s27, 1
      %p176 = por %p174, %p175
      %p178 = scmp.ne.s32.totalorder %s163, %s177
      %p179 = scmp.eq.s32.totalorder %s27, 0
      %p180 = por %p178, %p179
      %s181 = ssub.s32 %s28, %s40
      %p182 = scmp.eq.s32.totalorder %s181, 0
      %s184 = sadd.s32 %s183, 1
      %s185 = scalar_select %p182, %s183, %s184
      %p188 = pneg %p182
      %p189 = scmp.eq.s32.totalorder %s21, 1
      %p190 = por %p188, %p189
      %p191 = scmp.ne.s32.totalorder %s183, %s186
      %p192 = scmp.eq.s32.totalorder %s21, 0
      %p193 = por %p191, %p192
      %p194 = scmp.ne.s32.totalorder %s183, %s186
      %p195 = scmp.eq.s32.totalorder %s26, 1
      %p196 = por %p194, %p195
      %p197 = scmp.ne.s32.totalorder %s186, %s187
      %p198 = scmp.eq.s32.totalorder %s26, 0
      %p199 = por %p197, %p198
      %p200 = scmp.ne.s32.totalorder %s186, %s187
      %p201 = scmp.eq.s32.totalorder %s27, 1
      %p202 = por %p200, %p201
      %p204 = scmp.ne.s32.totalorder %s187, %s203
      %p205 = scmp.eq.s32.totalorder %s27, 0
      %p206 = por %p204, %p205
      %p207 = scmp.le.s32.totalorder 1, %s21
      %p208 = scmp.lt.s32.totalorder %s21, 3
      %p209 = pnand %p207, %p208
      %p210 = pneg %p209
      // Predicated region
      $region9: #{tpu_custom_call.1} parent=5 // pred_check
        _
      $region10: #{tpu_custom_call.1} parent=5 // pred_check_branch
        %212 = sbr.rel (%p209) target = $region12
      $region11: #{tpu_custom_call.1} parent=5 // pred_region
        %s213 = ssub.s32 %s21, 1
        // Predicated region
        $region13: #{tpu_custom_call.1} parent=11 // pred_check
          %p214 = pneg %p110
        $region14: #{tpu_custom_call.1} parent=11 // pred_check_branch
          %216 = sbr.rel (%p214) target = $region16
        $region15: #{tpu_custom_call.1} parent=11 // pred_region
          _
        $region16: #{tpu_custom_call.1} parent=11 // pred_fallthru
          _
        // Predicated region
        $region17: #{tpu_custom_call.1} parent=11 // pred_check
          %p217 = pneg %p131
        $region18: #{tpu_custom_call.1} parent=11 // pred_check_branch
          %219 = sbr.rel (%p217) target = $region20
        $region19: #{tpu_custom_call.1} parent=11 // pred_region
          _
        $region20: #{tpu_custom_call.1} parent=11 // pred_fallthru
          _
        // Predicated region
        $region21: #{tpu_custom_call.1} parent=11 // pred_check
          %p220 = pneg %p152
        $region22: #{tpu_custom_call.1} parent=11 // pred_check_branch
          %222 = sbr.rel (%p220) target = $region24
        $region23: #{tpu_custom_call.1} parent=11 // pred_region
          _
        $region24: #{tpu_custom_call.1} parent=11 // pred_fallthru
          _
        // Predicated region
        $region25: #{tpu_custom_call.1} parent=11 // pred_check
          %p223 = pneg %p173
        $region26: #{tpu_custom_call.1} parent=11 // pred_check_branch
          %225 = sbr.rel (%p223) target = $region28
        $region27: #{tpu_custom_call.1} parent=11 // pred_region
          _
        $region28: #{tpu_custom_call.1} parent=11 // pred_fallthru
          _
      $region12: #{tpu_custom_call.1} parent=5 // pred_fallthru
        _
      %p226 = scmp.lt.s32.totalorder %s21, 2
      // Predicated region
      $region29: #{tpu_custom_call.1} parent=5 // pred_check
        %p227 = pneg %p226
      $region30: #{tpu_custom_call.1} parent=5 // pred_check_branch
        %229 = sbr.rel (%p227) target = $region32
      $region31: #{tpu_custom_call.1} parent=5 // pred_region
        // Predicated region
        $region33: #{tpu_custom_call.1} parent=31 // pred_check
          %p230 = pneg %p55
        $region34: #{tpu_custom_call.1} parent=31 // pred_check_branch
          %232 = sbr.rel (%p230) target = $region36
        $region35: #{tpu_custom_call.1} parent=31 // pred_region
          %s233 = sand.u32 %s45, 1
          %s234 = scalar_lea.sflag [#allocation4], %s233
          %s235 = sand.u32 %s45, 1
          %s236 = smul.addr %s235, 16
          %s237 = scalar_lea.vmem [#allocation3], %s236
          %s238 = smul.u32 2, %s29
          %240 = vsyncadd %s234, 0
          %s241 = smul.addr %s28, 2
          %s242 = sadd.s32 %s238, %s241
          %s243 = smul.addr %s242, 8
          %s244 = scalar_lea.hbm %s0, %s243
          %s245 = sshll.u32 %s244, 4
          %s246 = int_to_ptr.hbm [resolvable:$true] %s245
          %s247 = sshll.u32 %s237, 4
          %s248 = int_to_ptr.vmem [resolvable:$true] %s247
          %253 = dma.hbm_to_vmem [thread:$0]  %s246, 256, %s248, %s234, 128, 128, 8
        $region36: #{tpu_custom_call.1} parent=31 // pred_fallthru
          _
        // Predicated region
        $region37: #{tpu_custom_call.1} parent=31 // pred_check
          %p254 = pneg %p83
        $region38: #{tpu_custom_call.1} parent=31 // pred_check_branch
          %256 = sbr.rel (%p254) target = $region40
        $region39: #{tpu_custom_call.1} parent=31 // pred_region
          %s257 = sand.u32 %s73, 1
          %s258 = scalar_lea.sflag [#allocation7], %s257
          %s259 = sand.u32 %s73, 1
          %s260 = smul.addr %s259, 16
          %s261 = scalar_lea.vmem [#allocation6], %s260
          %s262 = smul.u32 2, %s29
          %264 = vsyncadd %s258, 0
          %s265 = smul.addr %s28, 2
          %s266 = sadd.s32 %s262, %s265
          %s267 = smul.addr %s266, 8
          %s268 = scalar_lea.hbm %s1, %s267
          %s269 = sshll.u32 %s268, 4
          %s270 = int_to_ptr.hbm [resolvable:$true] %s269
          %s271 = sshll.u32 %s261, 4
          %s272 = int_to_ptr.vmem [resolvable:$true] %s271
          %277 = dma.hbm_to_vmem [thread:$0]  %s270, 256, %s272, %s258, 128, 128, 8
        $region40: #{tpu_custom_call.1} parent=31 // pred_fallthru
          _
      $region32: #{tpu_custom_call.1} parent=5 // pred_fallthru
        _
      %p278 = scmp.le.s32.totalorder 1, %s21
      %p279 = scmp.lt.s32.totalorder %s21, 3
      %p280 = pnand %p278, %p279
      %p281 = pneg %p280
      // Predicated region
      $region41: #{tpu_custom_call.1} parent=5 // pred_check
        _
      $region42: #{tpu_custom_call.1} parent=5 // pred_check_branch
        %283 = sbr.rel (%p280) target = $region44
      $region43: #{tpu_custom_call.1} parent=5 // pred_region
        %s284 = ssub.s32 %s21, 1
        %s285 = sand.u32 %s48, 1
        %s286 = scalar_lea.sflag [#allocation4], %s285
        %s287 = sand.u32 %s48, 1
        %s288 = smul.addr %s287, 16
        %s289 = scalar_lea.vmem [#allocation3], %s288
        // Predicated region
        $region45: #{tpu_custom_call.1} parent=43 // pred_check
          %p290 = pneg %p61
        $region46: #{tpu_custom_call.1} parent=43 // pred_check_branch
          %292 = sbr.rel (%p290) target = $region48
        $region47: #{tpu_custom_call.1} parent=43 // pred_region
          %294 = dma.done %s286, 256
        $region48: #{tpu_custom_call.1} parent=43 // pred_fallthru
          _
        %s295 = sand.u32 %s76, 1
        %s296 = scalar_lea.sflag [#allocation7], %s295
        %s297 = sand.u32 %s76, 1
        %s298 = smul.addr %s297, 16
        %s299 = scalar_lea.vmem [#allocation6], %s298
        // Predicated region
        $region49: #{tpu_custom_call.1} parent=43 // pred_check
          %p300 = pneg %p89
        $region50: #{tpu_custom_call.1} parent=43 // pred_check_branch
          %302 = sbr.rel (%p300) target = $region52
        $region51: #{tpu_custom_call.1} parent=43 // pred_region
          %304 = dma.done %s296, 256
        $region52: #{tpu_custom_call.1} parent=43 // pred_fallthru
          _
        %s305 = sand.u32 %s48, 1
        %s306 = scalar_lea.sflag [#allocation4], %s305
        %s307 = sand.u32 %s48, 1
        %s308 = smul.addr %s307, 16
        %s309 = scalar_lea.vmem [#allocation3], %s308
        %p310 = pneg %p61
        %p311 = pneg %p58
        %s312 = sand.u32 %s76, 1
        %s313 = scalar_lea.sflag [#allocation7], %s312
        %s314 = sand.u32 %s76, 1
        %s315 = smul.addr %s314, 16
        %s316 = scalar_lea.vmem [#allocation6], %s315
        %p317 = pneg %p89
        %p318 = pneg %p86
        %p319 = pneg %p110
        %p320 = pneg %p107
        %p321 = pneg %p131
        %p322 = pneg %p128
        %p323 = pneg %p152
        %p324 = pneg %p149
        %p325 = pneg %p173
        %p326 = pneg %p170
        %p327 = pneg %p199
        %p328 = pneg %p196
        %s329 = sand.u32 %s186, 1
        %s330 = scalar_lea.sflag [#allocation5], %s329
        %s331 = sand.u32 %s186, 1
        %s332 = scalar_lea.vmem [#allocation8], %s331
        %s333 = smul.u32 2, %s31
        %s334 = smul.u32 2, %s31
        %p336 = scmp.eq.s32.totalorder %s31, 0
        // Predicated region
        $region53: #{tpu_custom_call.1} parent=43 // pred_check
          %p337 = pneg %p336
        $region54: #{tpu_custom_call.1} parent=43 // pred_check_branch
          %339 = sbr.rel (%p337) target = $region56
        $region55: #{tpu_custom_call.1} parent=43 // pred_region
          %vm340 = vcmask 8192
          %341 = vst.msk [vmem:[#allocation2] sm:$0x1] %vm340, 0.0
        $region56: #{tpu_custom_call.1} parent=43 // pred_fallthru
          _
        %v342 = vld [vmem:[%s299] sm:$0xff]
        %v343 = vld [vmem:[%s299 + $0x8] sm:$0xff]
        %v344 = vld [vmem:[%s289] sm:$0xff]
        %v345 = vld [vmem:[%s289 + $0x8] sm:$0xff]
        %v346 = vsub.f32 %v342, %v344
        %v347 = vsub.f32 %v343, %v345
        %v348 = vpack.c.bf16 %v347, %v346
        %v349 = vld [vmem:[%s2] sm:$0xf]
        %v350 = vld [vmem:[%s2 + $0x4] sm:$0xf]
        %v351 = vld [vmem:[%s2 + $0x8] sm:$0xf]
        %v352 = vld [vmem:[%s2 + $0xc] sm:$0xf]
        %v353 = vld [vmem:[%s3] sm:$0x1]
        %v355 = vperm.slane %v353, 0
        %v361 = vunpack.c.l.b16 %v349
        %v362 = vunpack.c.l.b16 %v350
        %v363 = vunpack.c.l.b16 %v351
        %v364 = vunpack.c.l.b16 %v352
        %v365 = vpack.c.b16 %v362, %v361
        %v366 = vpack.c.b16 %v364, %v363
        %vm369 = vcmask 261120
        %v371 = vsel %vm369, %v348, 0
        %373 = vmatpush.bf16.msra.mxu0 0
        %374 = vmatpush.bf16.msra.mxu0 0
        %375 = vmatpush.bf16.msra.mxu0 0
        %376 = vmatpush.bf16.msra.mxu0 0
        %377 = vmatpush.bf16.msra.mxu0 0
        %378 = vmatpush.bf16.msra.mxu0 0
        %379 = vmatpush.bf16.msra.mxu0 %v366
        %380 = vmatpush.bf16.msra.mxu0 %v365
        %381 = vmatmul.bf16.gmra.mxu0 %v371
        %v382 = vpop.f32.mrf.mxu0
        %v383 = vadd.f32 %v355, %v382
        %v384 = vpop.f32.mrf.mxu0
        %v385 = vadd.f32 %v355, %v384
        %386 = vdwg.mxu0
        %v387 = vtanh.pop %v383
        %v388 = vtanh.pop %v385
        %v389 = vsel %vm369, %v387, 0.0
        %390 = vadd.xlane.f32.xlu0 %v389
        %v391 = vpop.xlane.xlu0 %390
        %v392 = vsel %vm369, %v388, 0.0
        %393 = vadd.xlane.f32.xlu0 %v392
        %v394 = vpop.xlane.xlu0 %393
        %v395 = vld [vmem:[%s4] sm:$0xff]
        %v396 = vld [vmem:[%s4 + $0x8] sm:$0xff]
        %v397 = vld [vmem:[#allocation2] sm:$0x1]
        %v398 = vmul.f32 %v391, %v395
        %v399 = vmul.f32 %v394, %v396
        %vm400 = vcmask 15360
        %v401 = vsel %vm400, %v398, 0.0
        %v402 = vsel %vm400, %v399, 0.0
        %v403 = vadd.f32 %v401, %v402
        %v404 = vrot.slane %v403, 4
        %v405 = vadd.f32 %v403, %v404
        %v406 = vrot.slane %v405, 2
        %v407 = vadd.f32 %v405, %v406
        %v408 = vrot.slane %v407, 1
        %v409 = vadd.f32 %v407, %v408
        %v410 = vadd.f32 %v397, %v409
        %vm411 = vcmask 8192
        %412 = vst.msk [vmem:[#allocation2] sm:$0x1] %vm411, %v410
        // Predicated region
        $region57: #{tpu_custom_call.1} parent=43 // pred_check
          %p413 = pneg %p336
        $region58: #{tpu_custom_call.1} parent=43 // pred_check_branch
          %415 = sbr.rel (%p413) target = $region60
        $region59: #{tpu_custom_call.1} parent=43 // pred_region
          %v416 = vld [vmem:[#allocation2] sm:$0x1]
          %v417 = vld [vmem:[%s5] sm:$0x1]
          %v418 = vadd.f32 %v416, %v417
          %v419 = vtanh.pop %v418
          %420 = vst.msk [vmem:[%s332] sm:$0x1] %vm411, %v419
        $region60: #{tpu_custom_call.1} parent=43 // pred_fallthru
          _
        %s421 = sand.u32 %s186, 1
        %s422 = scalar_lea.sflag [#allocation5], %s421
        %s423 = sand.u32 %s186, 1
        %s424 = scalar_lea.vmem [#allocation8], %s423
        // Predicated region
        $region61: #{tpu_custom_call.1} parent=43 // pred_check
          %p425 = pneg %p196
        $region62: #{tpu_custom_call.1} parent=43 // pred_check_branch
          %427 = sbr.rel (%p425) target = $region64
        $region63: #{tpu_custom_call.1} parent=43 // pred_region
          %429 = vsyncadd %s422, 0
          %s430 = scalar_lea.hbm %s6, %s30
          %s432 = sshll.u32 %s424, 4
          %s433 = int_to_ptr.vmem [resolvable:$true] %s432
          %s434 = sshll.u32 %s430, 4
          %s435 = int_to_ptr.hbm [resolvable:$true] %s434
          %437 = dma.vmem_to_hbm [thread:$0]  %s433, 16, %s435, %s422
        $region64: #{tpu_custom_call.1} parent=43 // pred_fallthru
          _
      $region44: #{tpu_custom_call.1} parent=5 // pred_fallthru
        _
      %p438 = scmp.le.s32.totalorder 2, %s21
      // Predicated region
      $region65: #{tpu_custom_call.1} parent=5 // pred_check
        %p439 = pneg %p438
      $region66: #{tpu_custom_call.1} parent=5 // pred_check_branch
        %441 = sbr.rel (%p439) target = $region68
      $region67: #{tpu_custom_call.1} parent=5 // pred_region
        %s442 = ssub.s32 %s21, 2
        // Predicated region
        $region69: #{tpu_custom_call.1} parent=67 // pred_check
          %p443 = pneg %p202
        $region70: #{tpu_custom_call.1} parent=67 // pred_check_branch
          %445 = sbr.rel (%p443) target = $region72
        $region71: #{tpu_custom_call.1} parent=67 // pred_region
          %s446 = sand.u32 %s187, 1
          %s447 = scalar_lea.sflag [#allocation5], %s446
          %s448 = sand.u32 %s187, 1
          %s449 = scalar_lea.vmem [#allocation8], %s448
          %451 = dma.done %s447, 16
        $region72: #{tpu_custom_call.1} parent=67 // pred_fallthru
          _
      $region68: #{tpu_custom_call.1} parent=5 // pred_fallthru
        _
    $region6: #{tpu_custom_call.1} parent=1 // loop_footer
      %s25 = sadd.s32 1, %s21
    $region7: #{tpu_custom_call.1} parent=1 // loop_footer_branch
      %20 = sbr.rel target = $region3
    $region8: #{tpu_custom_call.1} parent=1 // loop_exit
      _
    %452 = vsyncpa [#allocation4], 1
    %s453 = scalar_lea.sflag [#allocation4], 1
    %454 = vsyncpa %s453, 1
    %455 = vsyncpa [#allocation7], 1
    %s456 = scalar_lea.sflag [#allocation7], 1
    %457 = vsyncpa %s456, 1
    %458 = vsyncpa [#allocation5], 1
    %s459 = scalar_lea.sflag [#allocation5], 1
    %460 = vsyncpa %s459, 1

// kernel: tpu_custom_call.1
$region0: #{tpu_custom_call.1}
  #allocation0 [shape = 'u32[]', space=smem, size = 0x4, offset = 0x4, fixed_abs, tag = 'smem constant byte address 0x4 - core index']
  #allocation1 [shape = 'u32[72,128]{1,0:T(1,128)}', space=vmem, size = 0x9000, scoped, tag = 'internal scratch']
  #allocation2 [shape = 'f32[1,2]{1,0:T(1,128)}', space=vmem, size = 0x200, scoped, tag = 'scratch operand']
  %s0 = inlined_call_operand.hbm [shape: f32[2,16,32], index: 0, kind: input, shape index: {}]
  %s1 = inlined_call_operand.hbm [shape: f32[2,16,32], index: 1, kind: input, shape index: {}]
  %s2 = inlined_call_operand.vmem [shape: bf16[32,32], index: 2, kind: input, shape index: {}]
  %s3 = inlined_call_operand.vmem [shape: f32[1,32], index: 3, kind: input, shape index: {}]
  %s4 = inlined_call_operand.vmem [shape: f32[16,2], index: 4, kind: input, shape index: {}]
  %s5 = inlined_call_operand.vmem [shape: f32[1,2], index: 5, kind: input, shape index: {}]
  %s6 = inlined_call_operand.hbm [shape: f32[2,1,2], index: 6, kind: output, shape index: {}]
  %s7 = sld [smem:[#allocation0]]
  $region73: #{tpu_custom_call.1} parent=0
    _
  %s9 = ssub.s32 1, %s7
  %s10 = scalar_select 0, %s9, %s7
  $region1: #{tpu_custom_call.1} parent=0
    #allocation3 [shape = 'u8[16384]{0}', space=vmem, size = 0x4000, scoped, tag = 'input window, operand 0']
    #allocation4 [shape = 's32[2]{0}', space=sflag, size = 0x8, scoped, tag = 'scoped memory for tpu_custom_call.1']
    #allocation5 [shape = 's32[2]{0}', space=sflag, size = 0x8, scoped, tag = 'scoped memory for tpu_custom_call.1']
    #allocation6 [shape = 'u8[16384]{0}', space=vmem, size = 0x4000, scoped, tag = 'input window, operand 1']
    #allocation7 [shape = 's32[2]{0}', space=sflag, size = 0x8, scoped, tag = 'scoped memory for tpu_custom_call.1']
    #allocation8 [shape = 'u8[1024]{0}', space=vmem, size = 0x400, scoped, tag = 'output window, operand 0']
    %11 = vsyncpa [#allocation4], 0
    %s12 = scalar_lea.sflag [#allocation4], 1
    %13 = vsyncpa %s12, 0
    %14 = vsyncpa [#allocation7], 0
    %s15 = scalar_lea.sflag [#allocation7], 1
    %16 = vsyncpa %s15, 0
    %17 = vsyncpa [#allocation5], 0
    %s18 = scalar_lea.sflag [#allocation5], 1
    %19 = vsyncpa %s18, 0
    loop: start=0, step=1, limit=4
    $region2: #{tpu_custom_call.1} parent=1 // loop_pre_header
      _
    $region3: #{tpu_custom_call.1} parent=1 // loop_header
      %s21 = sphi 0, %s25
      %p22 = scmp.ge.s32.totalorder %s21, 4
      %s28 = sphi 0, %s40
      %s29 = sphi 0, %s36
      %s30 = sphi 0, %s28
      %s31 = sphi 0, %s29
      %s32 = sphi 0, %s30
      %s33 = sphi 0, %s31
      %s45 = sphi 0, %s47
      %s48 = sphi 0, %s45
      %s49 = sphi 0, %s48
      %s65 = sphi 0, %s49
      %s73 = sphi 0, %s75
      %s76 = sphi 0, %s73
      %s77 = sphi 0, %s76
      %s93 = sphi 0, %s77
      %s97 = sphi 0, %s97
      %s99 = sphi 0, %s97
      %s100 = sphi 0, %s99
      %s114 = sphi 0, %s100
      %s118 = sphi 0, %s118
      %s120 = sphi 0, %s118
      %s121 = sphi 0, %s120
      %s135 = sphi 0, %s121
      %s139 = sphi 0, %s139
      %s141 = sphi 0, %s139
      %s142 = sphi 0, %s141
      %s156 = sphi 0, %s142
      %s160 = sphi 0, %s160
      %s162 = sphi 0, %s160
      %s163 = sphi 0, %s162
      %s177 = sphi 0, %s163
      %s183 = sphi 0, %s185
      %s186 = sphi 0, %s183
      %s187 = sphi 0, %s186
      %s203 = sphi 0, %s187
    $region4: #{tpu_custom_call.1} parent=1 // loop_header_branch
      %24 = sbr.rel (%p22) target = $region8
    $region5: #{tpu_custom_call.1} parent=1 // loop_body
      %s26 = ssub.s32 %s21, 1
      %s27 = ssub.s32 %s21, 2
      %s34 = sadd.s32 1, %s29
      %p35 = scmp.ge.s32.totalorder %s34, 1
      %s36 = scalar_select %p35, 0, %s34
      %s37 = sadd.s32 1, %s28
      %s38 = scalar_select %p35, %s37, %s28
      %p39 = scmp.ge.s32.totalorder %s38, 2
      %s40 = scalar_select %p39, 0, %s38
      %s41 = ssub.s32 %s28, %s40
      %s42 = ssub.s32 %s29, %s36
      %s43 = sor.u32 %s41, %s42
      %p44 = scmp.eq.s32.totalorder %s43, 0
      %s46 = sadd.s32 %s45, 1
      %s47 = scalar_select %p44, %s45, %s46
      %p50 = pneg %p44
      %p51 = scmp.eq.s32.totalorder %s21, 1
      %p52 = por %p50, %p51
      %p53 = scmp.ne.s32.totalorder %s45, %s48
      %p54 = scmp.eq.s32.totalorder %s21, 0
      %p55 = por %p53, %p54
      %p56 = scmp.ne.s32.totalorder %s45, %s48
      %p57 = scmp.eq.s32.totalorder %s26, 1
      %p58 = por %p56, %p57
      %p59 = scmp.ne.s32.totalorder %s48, %s49
      %p60 = scmp.eq.s32.totalorder %s26, 0
      %p61 = por %p59, %p60
      %p62 = scmp.ne.s32.totalorder %s48, %s49
      %p63 = scmp.eq.s32.totalorder %s27, 1
      %p64 = por %p62, %p63
      %p66 = scmp.ne.s32.totalorder %s49, %s65
      %p67 = scmp.eq.s32.totalorder %s27, 0
      %p68 = por %p66, %p67
      %s69 = ssub.s32 %s28, %s40
      %s70 = ssub.s32 %s29, %s36
      %s71 = sor.u32 %s69, %s70
      %p72 = scmp.eq.s32.totalorder %s71, 0
      %s74 = sadd.s32 %s73, 1
      %s75 = scalar_select %p72, %s73, %s74
      %p78 = pneg %p72
      %p79 = scmp.eq.s32.totalorder %s21, 1
      %p80 = por %p78, %p79
      %p81 = scmp.ne.s32.totalorder %s73, %s76
      %p82 = scmp.eq.s32.totalorder %s21, 0
      %p83 = por %p81, %p82
      %p84 = scmp.ne.s32.totalorder %s73, %s76
      %p85 = scmp.eq.s32.totalorder %s26, 1
      %p86 = por %p84, %p85
      %p87 = scmp.ne.s32.totalorder %s76, %s77
      %p88 = scmp.eq.s32.totalorder %s26, 0
      %p89 = por %p87, %p88
      %p90 = scmp.ne.s32.totalorder %s76, %s77
      %p91 = scmp.eq.s32.totalorder %s27, 1
      %p92 = por %p90, %p91
      %p94 = scmp.ne.s32.totalorder %s77, %s93
      %p95 = scmp.eq.s32.totalorder %s27, 0
      %p96 = por %p94, %p95
      %s98 = sadd.s32 %s97, 1
      %p101 = scmp.eq.s32.totalorder %s21, 1
      %p102 = scmp.ne.s32.totalorder %s97, %s99
      %p103 = scmp.eq.s32.totalorder %s21, 0
      %p104 = por %p102, %p103
      %p105 = scmp.ne.s32.totalorder %s97, %s99
      %p106 = scmp.eq.s32.totalorder %s26, 1
      %p107 = por %p105, %p106
      %p108 = scmp.ne.s32.totalorder %s99, %s100
      %p109 = scmp.eq.s32.totalorder %s26, 0
      %p110 = por %p108, %p109
      %p111 = scmp.ne.s32.totalorder %s99, %s100
      %p112 = scmp.eq.s32.totalorder %s27, 1
      %p113 = por %p111, %p112
      %p115 = scmp.ne.s32.totalorder %s100, %s114
      %p116 = scmp.eq.s32.totalorder %s27, 0
      %p117 = por %p115, %p116
      %s119 = sadd.s32 %s118, 1
      %p122 = scmp.eq.s32.totalorder %s21, 1
      %p123 = scmp.ne.s32.totalorder %s118, %s120
      %p124 = scmp.eq.s32.totalorder %s21, 0
      %p125 = por %p123, %p124
      %p126 = scmp.ne.s32.totalorder %s118, %s120
      %p127 = scmp.eq.s32.totalorder %s26, 1
      %p128 = por %p126, %p127
      %p129 = scmp.ne.s32.totalorder %s120, %s121
      %p130 = scmp.eq.s32.totalorder %s26, 0
      %p131 = por %p129, %p130
      %p132 = scmp.ne.s32.totalorder %s120, %s121
      %p133 = scmp.eq.s32.totalorder %s27, 1
      %p134 = por %p132, %p133
      %p136 = scmp.ne.s32.totalorder %s121, %s135
      %p137 = scmp.eq.s32.totalorder %s27, 0
      %p138 = por %p136, %p137
      %s140 = sadd.s32 %s139, 1
      %p143 = scmp.eq.s32.totalorder %s21, 1
      %p144 = scmp.ne.s32.totalorder %s139, %s141
      %p145 = scmp.eq.s32.totalorder %s21, 0
      %p146 = por %p144, %p145
      %p147 = scmp.ne.s32.totalorder %s139, %s141
      %p148 = scmp.eq.s32.totalorder %s26, 1
      %p149 = por %p147, %p148
      %p150 = scmp.ne.s32.totalorder %s141, %s142
      %p151 = scmp.eq.s32.totalorder %s26, 0
      %p152 = por %p150, %p151
      %p153 = scmp.ne.s32.totalorder %s141, %s142
      %p154 = scmp.eq.s32.totalorder %s27, 1
      %p155 = por %p153, %p154
      %p157 = scmp.ne.s32.totalorder %s142, %s156
      %p158 = scmp.eq.s32.totalorder %s27, 0
      %p159 = por %p157, %p158
      %s161 = sadd.s32 %s160, 1
      %p164 = scmp.eq.s32.totalorder %s21, 1
      %p165 = scmp.ne.s32.totalorder %s160, %s162
      %p166 = scmp.eq.s32.totalorder %s21, 0
      %p167 = por %p165, %p166
      %p168 = scmp.ne.s32.totalorder %s160, %s162
      %p169 = scmp.eq.s32.totalorder %s26, 1
      %p170 = por %p168, %p169
      %p171 = scmp.ne.s32.totalorder %s162, %s163
      %p172 = scmp.eq.s32.totalorder %s26, 0
      %p173 = por %p171, %p172
      %p174 = scmp.ne.s32.totalorder %s162, %s163
      %p175 = scmp.eq.s32.totalorder %s27, 1
      %p176 = por %p174, %p175
      %p178 = scmp.ne.s32.totalorder %s163, %s177
      %p179 = scmp.eq.s32.totalorder %s27, 0
      %p180 = por %p178, %p179
      %s181 = ssub.s32 %s28, %s40
      %p182 = scmp.eq.s32.totalorder %s181, 0
      %s184 = sadd.s32 %s183, 1
      %s185 = scalar_select %p182, %s183, %s184
      %p188 = pneg %p182
      %p189 = scmp.eq.s32.totalorder %s21, 1
      %p190 = por %p188, %p189
      %p191 = scmp.ne.s32.totalorder %s183, %s186
      %p192 = scmp.eq.s32.totalorder %s21, 0
      %p193 = por %p191, %p192
      %p194 = scmp.ne.s32.totalorder %s183, %s186
      %p195 = scmp.eq.s32.totalorder %s26, 1
      %p196 = por %p194, %p195
      %p197 = scmp.ne.s32.totalorder %s186, %s187
      %p198 = scmp.eq.s32.totalorder %s26, 0
      %p199 = por %p197, %p198
      %p200 = scmp.ne.s32.totalorder %s186, %s187
      %p201 = scmp.eq.s32.totalorder %s27, 1
      %p202 = por %p200, %p201
      %p204 = scmp.ne.s32.totalorder %s187, %s203
      %p205 = scmp.eq.s32.totalorder %s27, 0
      %p206 = por %p204, %p205
      %p207 = scmp.le.s32.totalorder 1, %s21
      %p208 = scmp.lt.s32.totalorder %s21, 3
      %p209 = pnand %p207, %p208
      %p210 = pneg %p209
      // Predicated region
      $region9: #{tpu_custom_call.1} parent=5 // pred_check
        _
      $region10: #{tpu_custom_call.1} parent=5 // pred_check_branch
        %212 = sbr.rel (%p209) target = $region12
      $region11: #{tpu_custom_call.1} parent=5 // pred_region
        %s213 = ssub.s32 %s21, 1
        // Predicated region
        $region13: #{tpu_custom_call.1} parent=11 // pred_check
          %p214 = pneg %p110
        $region14: #{tpu_custom_call.1} parent=11 // pred_check_branch
          %216 = sbr.rel (%p214) target = $region16
        $region15: #{tpu_custom_call.1} parent=11 // pred_region
          _
        $region16: #{tpu_custom_call.1} parent=11 // pred_fallthru
          _
        // Predicated region
        $region17: #{tpu_custom_call.1} parent=11 // pred_check
          %p217 = pneg %p131
        $region18: #{tpu_custom_call.1} parent=11 // pred_check_branch
          %219 = sbr.rel (%p217) target = $region20
        $region19: #{tpu_custom_call.1} parent=11 // pred_region
          _
        $region20: #{tpu_custom_call.1} parent=11 // pred_fallthru
          _
        // Predicated region
        $region21: #{tpu_custom_call.1} parent=11 // pred_check
          %p220 = pneg %p152
        $region22: #{tpu_custom_call.1} parent=11 // pred_check_branch
          %222 = sbr.rel (%p220) target = $region24
        $region23: #{tpu_custom_call.1} parent=11 // pred_region
          _
        $region24: #{tpu_custom_call.1} parent=11 // pred_fallthru
          _
        // Predicated region
        $region25: #{tpu_custom_call.1} parent=11 // pred_check
          %p223 = pneg %p173
        $region26: #{tpu_custom_call.1} parent=11 // pred_check_branch
          %225 = sbr.rel (%p223) target = $region28
        $region27: #{tpu_custom_call.1} parent=11 // pred_region
          _
        $region28: #{tpu_custom_call.1} parent=11 // pred_fallthru
          _
      $region12: #{tpu_custom_call.1} parent=5 // pred_fallthru
        _
      %p226 = scmp.lt.s32.totalorder %s21, 2
      // Predicated region
      $region29: #{tpu_custom_call.1} parent=5 // pred_check
        %p227 = pneg %p226
      $region30: #{tpu_custom_call.1} parent=5 // pred_check_branch
        %229 = sbr.rel (%p227) target = $region32
      $region31: #{tpu_custom_call.1} parent=5 // pred_region
        // Predicated region
        $region33: #{tpu_custom_call.1} parent=31 // pred_check
          %p230 = pneg %p55
        $region34: #{tpu_custom_call.1} parent=31 // pred_check_branch
          %232 = sbr.rel (%p230) target = $region36
        $region35: #{tpu_custom_call.1} parent=31 // pred_region
          %s233 = sand.u32 %s45, 1
          %s234 = scalar_lea.sflag [#allocation4], %s233
          %s235 = sand.u32 %s45, 1
          %s236 = smul.addr %s235, 16
          %s237 = scalar_lea.vmem [#allocation3], %s236
          %s238 = smul.u32 2, %s29
          %240 = vsyncadd %s234, 0
          %s241 = smul.addr %s28, 2
          %s242 = sadd.s32 %s238, %s241
          %s243 = smul.addr %s242, 8
          %s244 = scalar_lea.hbm %s0, %s243
          %s245 = sshll.u32 %s244, 4
          %s246 = int_to_ptr.hbm [resolvable:$true] %s245
          %s247 = sshll.u32 %s237, 4
          %s248 = int_to_ptr.vmem [resolvable:$true] %s247
          %253 = dma.hbm_to_vmem [thread:$0]  %s246, 256, %s248, %s234, 128, 128, 8
        $region36: #{tpu_custom_call.1} parent=31 // pred_fallthru
          _
        // Predicated region
        $region37: #{tpu_custom_call.1} parent=31 // pred_check
          %p254 = pneg %p83
        $region38: #{tpu_custom_call.1} parent=31 // pred_check_branch
          %256 = sbr.rel (%p254) target = $region40
        $region39: #{tpu_custom_call.1} parent=31 // pred_region
          %s257 = sand.u32 %s73, 1
          %s258 = scalar_lea.sflag [#allocation7], %s257
          %s259 = sand.u32 %s73, 1
          %s260 = smul.addr %s259, 16
          %s261 = scalar_lea.vmem [#allocation6], %s260
          %s262 = smul.u32 2, %s29
          %264 = vsyncadd %s258, 0
          %s265 = smul.addr %s28, 2
          %s266 = sadd.s32 %s262, %s265
          %s267 = smul.addr %s266, 8
          %s268 = scalar_lea.hbm %s1, %s267
          %s269 = sshll.u32 %s268, 4
          %s270 = int_to_ptr.hbm [resolvable:$true] %s269
          %s271 = sshll.u32 %s261, 4
          %s272 = int_to_ptr.vmem [resolvable:$true] %s271
          %277 = dma.hbm_to_vmem [thread:$0]  %s270, 256, %s272, %s258, 128, 128, 8
        $region40: #{tpu_custom_call.1} parent=31 // pred_fallthru
          _
      $region32: #{tpu_custom_call.1} parent=5 // pred_fallthru
        _
      %p278 = scmp.le.s32.totalorder 1, %s21
      %p279 = scmp.lt.s32.totalorder %s21, 3
      %p280 = pnand %p278, %p279
      %p281 = pneg %p280
      // Predicated region
      $region41: #{tpu_custom_call.1} parent=5 // pred_check
        _
      $region42: #{tpu_custom_call.1} parent=5 // pred_check_branch
        %283 = sbr.rel (%p280) target = $region44
      $region43: #{tpu_custom_call.1} parent=5 // pred_region
        %s284 = ssub.s32 %s21, 1
        %s285 = sand.u32 %s48, 1
        %s286 = scalar_lea.sflag [#allocation4], %s285
        %s287 = sand.u32 %s48, 1
        %s288 = smul.addr %s287, 16
        %s289 = scalar_lea.vmem [#allocation3], %s288
        // Predicated region
        $region45: #{tpu_custom_call.1} parent=43 // pred_check
          %p290 = pneg %p61
        $region46: #{tpu_custom_call.1} parent=43 // pred_check_branch
          %292 = sbr.rel (%p290) target = $region48
        $region47: #{tpu_custom_call.1} parent=43 // pred_region
          %294 = dma.done %s286, 256
        $region48: #{tpu_custom_call.1} parent=43 // pred_fallthru
          _
        %s295 = sand.u32 %s76, 1
        %s296 = scalar_lea.sflag [#allocation7], %s295
        %s297 = sand.u32 %s76, 1
        %s298 = smul.addr %s297, 16
        %s299 = scalar_lea.vmem [#allocation6], %s298
        // Predicated region
        $region49: #{tpu_custom_call.1} parent=43 // pred_check
          %p300 = pneg %p89
        $region50: #{tpu_custom_call.1} parent=43 // pred_check_branch
          %302 = sbr.rel (%p300) target = $region52
        $region51: #{tpu_custom_call.1} parent=43 // pred_region
          %304 = dma.done %s296, 256
        $region52: #{tpu_custom_call.1} parent=43 // pred_fallthru
          _
        %s305 = sand.u32 %s48, 1
        %s306 = scalar_lea.sflag [#allocation4], %s305
        %s307 = sand.u32 %s48, 1
        %s308 = smul.addr %s307, 16
        %s309 = scalar_lea.vmem [#allocation3], %s308
        %p310 = pneg %p61
        %p311 = pneg %p58
        %s312 = sand.u32 %s76, 1
        %s313 = scalar_lea.sflag [#allocation7], %s312
        %s314 = sand.u32 %s76, 1
        %s315 = smul.addr %s314, 16
        %s316 = scalar_lea.vmem [#allocation6], %s315
        %p317 = pneg %p89
        %p318 = pneg %p86
        %p319 = pneg %p110
        %p320 = pneg %p107
        %p321 = pneg %p131
        %p322 = pneg %p128
        %p323 = pneg %p152
        %p324 = pneg %p149
        %p325 = pneg %p173
        %p326 = pneg %p170
        %p327 = pneg %p199
        %p328 = pneg %p196
        %s329 = sand.u32 %s186, 1
        %s330 = scalar_lea.sflag [#allocation5], %s329
        %s331 = sand.u32 %s186, 1
        %s332 = scalar_lea.vmem [#allocation8], %s331
        %s333 = smul.u32 2, %s31
        %s334 = smul.u32 2, %s31
        %p336 = scmp.eq.s32.totalorder %s31, 0
        // Predicated region
        $region53: #{tpu_custom_call.1} parent=43 // pred_check
          %p337 = pneg %p336
        $region54: #{tpu_custom_call.1} parent=43 // pred_check_branch
          %339 = sbr.rel (%p337) target = $region56
        $region55: #{tpu_custom_call.1} parent=43 // pred_region
          %vm340 = vcmask 8192
          %341 = vst.msk [vmem:[#allocation2] sm:$0x1] %vm340, 0.0
        $region56: #{tpu_custom_call.1} parent=43 // pred_fallthru
          _
        %v342 = vld [vmem:[%s299] sm:$0xff]
        %v343 = vld [vmem:[%s299 + $0x8] sm:$0xff]
        %v344 = vld [vmem:[%s289] sm:$0xff]
        %v345 = vld [vmem:[%s289 + $0x8] sm:$0xff]
        %v346 = vsub.f32 %v342, %v344
        %v347 = vsub.f32 %v343, %v345
        %v348 = vpack.c.bf16 %v347, %v346
        %v349 = vld [vmem:[%s2] sm:$0xf]
        %v350 = vld [vmem:[%s2 + $0x4] sm:$0xf]
        %v351 = vld [vmem:[%s2 + $0x8] sm:$0xf]
        %v352 = vld [vmem:[%s2 + $0xc] sm:$0xf]
        %v353 = vld [vmem:[%s3] sm:$0x1]
        %v355 = vperm.slane %v353, 0
        %v361 = vunpack.c.l.b16 %v349
        %v362 = vunpack.c.l.b16 %v350
        %v363 = vunpack.c.l.b16 %v351
        %v364 = vunpack.c.l.b16 %v352
        %v365 = vpack.c.b16 %v362, %v361
        %v366 = vpack.c.b16 %v364, %v363
        %vm369 = vcmask 261120
        %v371 = vsel %vm369, %v348, 0
        %373 = vmatpush.bf16.msra.mxu0 0
        %374 = vmatpush.bf16.msra.mxu0 0
        %375 = vmatpush.bf16.msra.mxu0 0
        %376 = vmatpush.bf16.msra.mxu0 0
        %377 = vmatpush.bf16.msra.mxu0 0
        %378 = vmatpush.bf16.msra.mxu0 0
        %379 = vmatpush.bf16.msra.mxu0 %v366
        %380 = vmatpush.bf16.msra.mxu0 %v365
        %381 = vmatmul.bf16.gmra.mxu0 %v371
        %v382 = vpop.f32.mrf.mxu0
        %v383 = vadd.f32 %v355, %v382
        %v384 = vpop.f32.mrf.mxu0
        %v385 = vadd.f32 %v355, %v384
        %386 = vdwg.mxu0
        %v387 = vtanh.pop %v383
        %v388 = vtanh.pop %v385
        %v389 = vsel %vm369, %v387, 0.0
        %390 = vadd.xlane.f32.xlu0 %v389
        %v391 = vpop.xlane.xlu0 %390
        %v392 = vsel %vm369, %v388, 0.0
        %393 = vadd.xlane.f32.xlu0 %v392
        %v394 = vpop.xlane.xlu0 %393
        %v395 = vld [vmem:[%s4] sm:$0xff]
        %v396 = vld [vmem:[%s4 + $0x8] sm:$0xff]
        %v397 = vld [vmem:[#allocation2] sm:$0x1]
        %v398 = vmul.f32 %v391, %v395
        %v399 = vmul.f32 %v394, %v396
        %vm400 = vcmask 15360
        %v401 = vsel %vm400, %v398, 0.0
        %v402 = vsel %vm400, %v399, 0.0
        %v403 = vadd.f32 %v401, %v402
        %v404 = vrot.slane %v403, 4
        %v405 = vadd.f32 %v403, %v404
        %v406 = vrot.slane %v405, 2
        %v407 = vadd.f32 %v405, %v406
        %v408 = vrot.slane %v407, 1
        %v409 = vadd.f32 %v407, %v408
        %v410 = vadd.f32 %v397, %v409
        %vm411 = vcmask 8192
        %412 = vst.msk [vmem:[#allocation2] sm:$0x1] %vm411, %v410
        // Predicated region
        $region57: #{tpu_custom_call.1} parent=43 // pred_check
          %p413 = pneg %p336
        $region58: #{tpu_custom_call.1} parent=43 // pred_check_branch
          %415 = sbr.rel (%p413) target = $region60
        $region59: #{tpu_custom_call.1} parent=43 // pred_region
          %v416 = vld [vmem:[#allocation2] sm:$0x1]
          %v417 = vld [vmem:[%s5] sm:$0x1]
          %v418 = vadd.f32 %v416, %v417
          %v419 = vtanh.pop %v418
          %420 = vst.msk [vmem:[%s332] sm:$0x1] %vm411, %v419
        $region60: #{tpu_custom_call.1} parent=43 // pred_fallthru
          _
        %s421 = sand.u32 %s186, 1
        %s422 = scalar_lea.sflag [#allocation5], %s421
        %s423 = sand.u32 %s186, 1
        %s424 = scalar_lea.vmem [#allocation8], %s423
        // Predicated region
        $region61: #{tpu_custom_call.1} parent=43 // pred_check
          %p425 = pneg %p196
        $region62: #{tpu_custom_call.1} parent=43 // pred_check_branch
          %427 = sbr.rel (%p425) target = $region64
        $region63: #{tpu_custom_call.1} parent=43 // pred_region
          %429 = vsyncadd %s422, 0
          %s430 = scalar_lea.hbm %s6, %s30
          %s432 = sshll.u32 %s424, 4
          %s433 = int_to_ptr.vmem [resolvable:$true] %s432
          %s434 = sshll.u32 %s430, 4
          %s435 = int_to_ptr.hbm [resolvable:$true] %s434
          %437 = dma.vmem_to_hbm [thread:$0]  %s433, 16, %s435, %s422
        $region64: #{tpu_custom_call.1} parent=43 // pred_fallthru
          _
      $region44: #{tpu_custom_call.1} parent=5 // pred_fallthru
        _
      %p438 = scmp.le.s32.totalorder 2, %s21
      // Predicated region
      $region65: #{tpu_custom_call.1} parent=5 // pred_check
        %p439 = pneg %p438
      $region66: #{tpu_custom_call.1} parent=5 // pred_check_branch
        %441 = sbr.rel (%p439) target = $region68
      $region67: #{tpu_custom_call.1} parent=5 // pred_region
        %s442 = ssub.s32 %s21, 2
        // Predicated region
        $region69: #{tpu_custom_call.1} parent=67 // pred_check
          %p443 = pneg %p202
        $region70: #{tpu_custom_call.1} parent=67 // pred_check_branch
          %445 = sbr.rel (%p443) target = $region72
        $region71: #{tpu_custom_call.1} parent=67 // pred_region
          %s446 = sand.u32 %s187, 1
          %s447 = scalar_lea.sflag [#allocation5], %s446
          %s448 = sand.u32 %s187, 1
          %s449 = scalar_lea.vmem [#allocation8], %s448
          %451 = dma.done %s447, 16
        $region72: #{tpu_custom_call.1} parent=67 // pred_fallthru
          _
      $region68: #{tpu_custom_call.1} parent=5 // pred_fallthru
        _
    $region6: #{tpu_custom_call.1} parent=1 // loop_footer
      %s25 = sadd.s32 1, %s21
    $region7: #{tpu_custom_call.1} parent=1 // loop_footer_branch
      %20 = sbr.rel target = $region3
    $region8: #{tpu_custom_call.1} parent=1 // loop_exit
      _
    %452 = vsyncpa [#allocation4], 1
    %s453 = scalar_lea.sflag [#allocation4], 1
    %454 = vsyncpa %s453, 1
    %455 = vsyncpa [#allocation7], 1
    %s456 = scalar_lea.sflag [#allocation7], 1
    %457 = vsyncpa %s456, 1
    %458 = vsyncpa [#allocation5], 1
    %s459 = scalar_lea.sflag [#allocation5], 1
    %460 = vsyncpa %s459, 1

</llo_original>
